<compile_context>
chip_gen: v7x
topology: tpu7x:2x2x1
jax: 0.10.0
libtpu: 0.0.40
codegen_flags: <defaults>
</compile_context>

<pallas_src>
import functools

import jax
import jax.numpy as jnp
import numpy as np
from jax import lax
from jax.experimental import pallas as pl
from jax.experimental.pallas import tpu as pltpu

factors = [1, 1, 1, 1, 1 / 2, 1 / 4, 1 / 8, 1 / 16, 1 / 32]
EPS = 1e-8
LRELU = 0.2
VMEM_LIMIT = 48 * 1024 * 1024    # scoped-VMEM request: fits v7x (64 MiB phys), ample on v5e/v6e
VMEM_BUDGET = 40 * 1024 * 1024   # conservative per-call footprint budget checked in wrappers


def _leaky(x):
    return jnp.where(x > 0, x, LRELU * x)


# --------------------------------------------------------------------------
# Slab layout helpers (wrapper / XLA side, cheap data movement only).
#   slab[n, c, E + yp*(W+2) + xp] = image[n, c, yp-1, xp-1] for the interior,
#   zero on the pad ring and on the two extensions of length E = W+3.
# --------------------------------------------------------------------------
def _ext(W):
    return W + 3                       # >= largest tap offset (W+2)+1


def _slab_len(H, W):
    return (H + 2) * (W + 2) + 2 * _ext(W)


def _to_slab(x, compute_dtype):
    """(N, C, H, W) NCHW -> padded-extended flattened slab (N, C, L)."""
    N, C, H, W = x.shape
    xp = jnp.pad(x, ((0, 0), (0, 0), (1, 1), (1, 1)))
    flat = xp.reshape(N, C, (H + 2) * (W + 2))
    e = _ext(W)
    return jnp.pad(flat, ((0, 0), (0, 0), (e, e))).astype(compute_dtype)


def _from_slab(slab, H, W):
    N, C, _ = slab.shape
    e = _ext(W)
    core = slab[:, :, e:e + (H + 2) * (W + 2)].reshape(N, C, H + 2, W + 2)
    return core[:, :, 1:H + 1, 1:W + 1]


def _upsample_slab_2x(slab, H, W, compute_dtype):
    # TODO(synk): fuse the nearest-neighbour 2x upsample into the block kernel
    # (polyphase decomposition of conv1∘upsample) so the 4x tensor never hits HBM.
    x = _from_slab(slab, H, W)
    up = jnp.repeat(jnp.repeat(x, 2, axis=2), 2, axis=3)
    return _to_slab(up, compute_dtype)


def _border_mask(H, W):
    """(1, (H+2)*(W+2)) f32 mask: 1 on interior pixels, 0 on the pad ring."""
    yy, xx = np.meshgrid(np.arange(H + 2), np.arange(W + 2), indexing="ij")
    m = ((yy >= 1) & (yy <= H) & (xx >= 1) & (xx <= W)).astype(np.float32)
    return jnp.asarray(m.reshape(1, (H + 2) * (W + 2)))


def _fold_conv3x3_weight(w_t, compute_dtype):
    """torch (Cout, Cin, 3, 3) -> (9, Cout, Cin) with the WSConv scale folded in."""
    Cout, Cin = w_t.shape[0], w_t.shape[1]
    scale = float((2.0 / (Cin * 9)) ** 0.5)
    return jnp.transpose(w_t * scale, (2, 3, 0, 1)).reshape(9, Cout, Cin).astype(compute_dtype)


def _check_vmem(n_bytes, where):
    if n_bytes > VMEM_BUDGET:
        raise NotImplementedError(
            f"{where}: estimated VMEM footprint {n_bytes / 2**20:.1f} MiB exceeds "
            f"{VMEM_BUDGET / 2**20:.0f} MiB budget. "
            "TODO(synk): add row-band (halo) spatial tiling for large resolutions.")


# --------------------------------------------------------------------------
# Shared in-kernel conv helper: 9 shifted tap loads -> 9 accumulated MXU
# matmuls (f32 acc) -> bias + LeakyReLU + PixelNorm -> border mask.
# --------------------------------------------------------------------------
def _conv3x3_lrelu_pn(load_tap, w_ref, bias, mask, W):
    acc = None
    for dy in (-1, 0, 1):
        for dx in (-1, 0, 1):
            k = (dy + 1) * 3 + (dx + 1)
            off = dy * (W + 2) + dx
            t = jnp.dot(w_ref[k], load_tap(off), preferred_element_type=jnp.float32)
            acc = t if acc is None else acc + t
    y = _leaky(acc + bias)
    y = y * lax.rsqrt(jnp.mean(y * y, axis=0, keepdims=True) + EPS)
    return y * mask


# --------------------------------------------------------------------------
# Kernel 1: initial  PixelNorm(z) -> ConvTranspose2d(z,C,4,1,0) -> LeakyReLU.
# A 1x1 -> 4x4 transposed conv is exactly a matmul (N, Z) @ (Z, C*16).
# TODO(synk): fuse this tiny kernel with the first 3x3 conv (4x4 data).
# --------------------------------------------------------------------------
def init_kernel(x_ref, w_ref, b_ref, o_ref):
    x = x_ref[...].astype(jnp.float32)                                 # (N, Z)
    xn = x * lax.rsqrt(jnp.mean(x * x, axis=-1, keepdims=True) + EPS)
    y = jnp.dot(xn.astype(w_ref.dtype), w_ref[...],
                preferred_element_type=jnp.float32) + b_ref[...]
    o_ref[...] = _leaky(y).astype(o_ref.dtype)


def initial_block(x_nz, params, compute_dtype):
    N, Z = x_nz.shape
    C = params["ct_w"].shape[1]
    w2 = params["ct_w"].reshape(Z, 16 * C).astype(compute_dtype)       # (c,h,w)-minor
    b2 = jnp.repeat(params["ct_b"], 16)[None, :].astype(jnp.float32)
    out = pl.pallas_call(
        init_kernel,
        out_shape=jax.ShapeDtypeStruct((N, 16 * C), compute_dtype),
        grid=(1,),
        in_specs=[
            pl.BlockSpec((N, Z), lambda i: (0, 0)),
            pl.BlockSpec((Z, 16 * C), lambda i: (0, 0)),
            pl.BlockSpec((1, 16 * C), lambda i: (0, 0)),
        ],
        out_specs=pl.BlockSpec((N, 16 * C), lambda i: (0, 0)),
        compiler_params=pltpu.CompilerParams(
            dimension_semantics=("arbitrary",), vmem_limit_bytes=VMEM_LIMIT),
    )(x_nz, w2, b2)
    return out.reshape(N, C, 4, 4)                                     # NCHW (tiny)


# --------------------------------------------------------------------------
# Kernel 2: single WSConv3x3 + LeakyReLU + PixelNorm on a slab.
# --------------------------------------------------------------------------
def conv_pn_kernel(x_ref, w_ref, b_ref, mask_ref, o_ref, *, H, W):
    Sp = (H + 2) * (W + 2)
    E = W + 3
    y = _conv3x3_lrelu_pn(lambda off: x_ref[0, :, pl.ds(E + off, Sp)],
                          w_ref, b_ref[...], mask_ref[...], W)
    o_ref[...] = jnp.zeros(o_ref.shape, o_ref.dtype)
    o_ref[0, :, pl.ds(E, Sp)] = y.astype(o_ref.dtype)


def ws_conv3x3_pn(x_slab, H, W, w_t, b, compute_dtype):
    N, Cin, L = x_slab.shape
    Cout = w_t.shape[0]
    Sp = (H + 2) * (W + 2)
    wst = _fold_conv3x3_weight(w_t, compute_dtype)
    bm = b.reshape(Cout, 1).astype(jnp.float32)
    mask = _border_mask(H, W)
    itemsize = jnp.dtype(compute_dtype).itemsize
    _check_vmem(2 * (Cin + Cout) * L * itemsize + 18 * Cout * Cin * itemsize
                + 4 * (Cin + 2 * Cout) * Sp, "ws_conv3x3_pn")
    kernel = functools.partial(conv_pn_kernel, H=H, W=W)
    # TODO(synk): if N == 1, split the grid over output channels or row bands so
    # both v7x TensorCores get work.
    return pl.pallas_call(
        kernel,
        out_shape=jax.ShapeDtypeStruct((N, Cout, L), compute_dtype),
        grid=(N,),
        in_specs=[
            pl.BlockSpec((1, Cin, L), lambda n: (n, 0, 0)),
            pl.BlockSpec((9, Cout, Cin), lambda n: (0, 0, 0)),   # weights resident
            pl.BlockSpec((Cout, 1), lambda n: (0, 0)),
            pl.BlockSpec((1, Sp), lambda n: (0, 0)),
        ],
        out_specs=pl.BlockSpec((1, Cout, L), lambda n: (n, 0, 0)),
        compiler_params=pltpu.CompilerParams(
            dimension_semantics=("parallel",), vmem_limit_bytes=VMEM_LIMIT),
    )(x_slab, wst, bm, mask)


# --------------------------------------------------------------------------
# Kernel 3: fused progressive block.
#   conv1(3x3) + LReLU + PixelNorm  ->  h (VMEM scratch slab, never in HBM)
#   conv2(3x3) + LReLU + PixelNorm  ->  output slab
# --------------------------------------------------------------------------
def prog_block_kernel(x_ref, w1_ref, b1_ref, w2_ref, b2_ref, mask_ref,
                      o_ref, h_ref, *, H, W):
    Sp = (H + 2) * (W + 2)
    E = W + 3
    mask = mask_ref[...]
    h = _conv3x3_lrelu_pn(lambda off: x_ref[0, :, pl.ds(E + off, Sp)],
                          w1_ref, b1_ref[...], mask, W)
    # Stash h as a full slab in VMEM scratch (zero extensions + masked borders
    # keep the slab invariant so conv2 can use the same shifted-tap loads).
    h_ref[...] = jnp.zeros(h_ref.shape, h_ref.dtype)
    h_ref[:, pl.ds(E, Sp)] = h.astype(h_ref.dtype)
    z = _conv3x3_lrelu_pn(lambda off: h_ref[:, pl.ds(E + off, Sp)],
                          w2_ref, b2_ref[...], mask, W)
    o_ref[...] = jnp.zeros(o_ref.shape, o_ref.dtype)
    o_ref[0, :, pl.ds(E, Sp)] = z.astype(o_ref.dtype)


def prog_block(x_slab, H, W, blk, compute_dtype):
    N, Cin, L = x_slab.shape
    Cmid, Cout = blk["w1"].shape[0], blk["w2"].shape[0]
    Sp = (H + 2) * (W + 2)
    w1 = _fold_conv3x3_weight(blk["w1"], compute_dtype)
    b1 = blk["b1"].reshape(Cmid, 1).astype(jnp.float32)
    w2 = _fold_conv3x3_weight(blk["w2"], compute_dtype)
    b2 = blk["b2"].reshape(Cout, 1).astype(jnp.float32)
    mask = _border_mask(H, W)
    itemsize = jnp.dtype(compute_dtype).itemsize
    _check_vmem(2 * (Cin + Cout) * L * itemsize + Cmid * L * itemsize
                + 18 * (Cmid * Cin + Cout * Cmid) * itemsize
                + 4 * (Cin + 2 * Cmid + Cout + 2) * Sp, "prog_block")
    kernel = functools.partial(prog_block_kernel, H=H, W=W)
    return pl.pallas_call(
        kernel,
        out_shape=jax.ShapeDtypeStruct((N, Cout, L), compute_dtype),
        grid=(N,),
        in_specs=[
            pl.BlockSpec((1, Cin, L), lambda n: (n, 0, 0)),
            pl.BlockSpec((9, Cmid, Cin), lambda n: (0, 0, 0)),
            pl.BlockSpec((Cmid, 1), lambda n: (0, 0)),
            pl.BlockSpec((9, Cout, Cmid), lambda n: (0, 0, 0)),
            pl.BlockSpec((Cout, 1), lambda n: (0, 0)),
            pl.BlockSpec((1, Sp), lambda n: (0, 0)),
        ],
        out_specs=pl.BlockSpec((1, Cout, L), lambda n: (n, 0, 0)),
        scratch_shapes=[pltpu.VMEM((Cmid, L), compute_dtype)],
        compiler_params=pltpu.CompilerParams(
            dimension_semantics=("parallel",), vmem_limit_bytes=VMEM_LIMIT),
    )(x_slab, w1, b1, w2, b2, mask)


# --------------------------------------------------------------------------
# Kernel 4: RGB 1x1 WSConvs (plain, and fused fade-in with tanh).
# TODO(synk): add spatial tiling for very large final resolutions.
# --------------------------------------------------------------------------
def rgb_kernel(x_ref, w_ref, b_ref, o_ref):
    o_ref[0] = (jnp.dot(w_ref[...], x_ref[0],
                        preferred_element_type=jnp.float32) + b_ref[...]).astype(o_ref.dtype)


def rgb_conv(x_slab, H, W, w_t, b, compute_dtype):
    N, Cin, L = x_slab.shape
    Cimg = w_t.shape[0]
    wm = (w_t.reshape(Cimg, Cin) * float((2.0 / Cin) ** 0.5)).astype(compute_dtype)
    bm = b.reshape(Cimg, 1).astype(jnp.float32)
    res = pl.pallas_call(
        rgb_kernel,
        out_shape=jax.ShapeDtypeStruct((N, Cimg, L), jnp.float32),
        grid=(N,),
        in_specs=[
            pl.BlockSpec((1, Cin, L), lambda n: (n, 0, 0)),
            pl.BlockSpec((Cimg, Cin), lambda n: (0, 0)),
            pl.BlockSpec((Cimg, 1), lambda n: (0, 0)),
        ],
        out_specs=pl.BlockSpec((1, Cimg, L), lambda n: (n, 0, 0)),
        compiler_params=pltpu.CompilerParams(
            dimension_semantics=("parallel",), vmem_limit_bytes=VMEM_LIMIT),
    )(x_slab, wm, bm)
    return _from_slab(res, H, W)


def rgb_fade_kernel(up_ref, out_ref, wu_ref, bu_ref, wo_ref, bo_ref, o_ref, *, alpha):
    ru = jnp.dot(wu_ref[...], up_ref[0], preferred_element_type=jnp.float32) + bu_ref[...]
    ro = jnp.dot(wo_ref[...], out_ref[0], preferred_element_type=jnp.float32) + bo_ref[...]
    o_ref[0] = jnp.tanh(alpha * ro + (1.0 - alpha) * ru).astype(o_ref.dtype)


def rgb_fade(up_slab, out_slab, H, W, wu_t, bu, wo_t, bo, alpha, compute_dtype):
    N, Cu, L = up_slab.shape
    Co, Cimg = out_slab.shape[1], wu_t.shape[0]
    wum = (wu_t.reshape(Cimg, Cu) * float((2.0 / Cu) ** 0.5)).astype(compute_dtype)
    wom = (wo_t.reshape(Cimg, Co) * float((2.0 / Co) ** 0.5)).astype(compute_dtype)
    bum = bu.reshape(Cimg, 1).astype(jnp.float32)
    bom = bo.reshape(Cimg, 1).astype(jnp.float32)
    kernel = functools.partial(rgb_fade_kernel, alpha=float(alpha))
    res = pl.pallas_call(
        kernel,
        out_shape=jax.ShapeDtypeStruct((N, Cimg, L), jnp.float32),
        grid=(N,),
        in_specs=[
            pl.BlockSpec((1, Cu, L), lambda n: (n, 0, 0)),
            pl.BlockSpec((1, Co, L), lambda n: (n, 0, 0)),
            pl.BlockSpec((Cimg, Cu), lambda n: (0, 0)),
            pl.BlockSpec((Cimg, 1), lambda n: (0, 0)),
            pl.BlockSpec((Cimg, Co), lambda n: (0, 0)),
            pl.BlockSpec((Cimg, 1), lambda n: (0, 0)),
        ],
        out_specs=pl.BlockSpec((1, Cimg, L), lambda n: (n, 0, 0)),
        compiler_params=pltpu.CompilerParams(
            dimension_semantics=("parallel",), vmem_limit_bytes=VMEM_LIMIT),
    )(up_slab, out_slab, wum, bum, wom, bom)
    return _from_slab(res, H, W)


# --------------------------------------------------------------------------
# Generator forward (Pallas)
# --------------------------------------------------------------------------
def generator_forward(params, x, alpha, steps, compute_dtype=jnp.bfloat16):
    # x: (N, z_dim, 1, 1) NCHW at the boundary; returns NCHW float32 image.
    N, Z = x.shape[0], x.shape[1]
    x_nz = x.reshape(N, Z).astype(jnp.float32)

    out4 = initial_block(x_nz, params, compute_dtype)                  # (N, C, 4, 4)
    H = W = 4
    out_slab = ws_conv3x3_pn(_to_slab(out4, compute_dtype), H, W,
                             params["init_w"], params["init_b"], compute_dtype)

    if steps == 0:
        return rgb_conv(out_slab, H, W, params["rgb_w"][0], params["rgb_b"][0],
                        compute_dtype)

    up_slab = out_slab
    for step in range(steps):
        up_slab = _upsample_slab_2x(out_slab, H, W, compute_dtype)
        H, W = 2 * H, 2 * W
        out_slab = prog_block(up_slab, H, W, params["blocks"][step], compute_dtype)

    return rgb_fade(up_slab, out_slab, H, W,
                    params["rgb_w"][steps - 1], params["rgb_b"][steps - 1],
                    params["rgb_w"][steps], params["rgb_b"][steps],
                    alpha, compute_dtype)


# --------------------------------------------------------------------------
# Pure-JAX reference (mirrors the PyTorch module) for validation.
# --------------------------------------------------------------------------
def _ref_pn(x):
    return x * lax.rsqrt(jnp.mean(x * x, axis=1, keepdims=True) + EPS)


def _ref_wsconv(x, w, b, k, pad):
    cin = w.shape[1]
    scale = (2.0 / (cin * k * k)) ** 0.5
    y = lax.conv_general_dilated(x * scale, w, (1, 1), [(pad, pad), (pad, pad)],
                                 dimension_numbers=("NCHW", "OIHW", "NCHW"))
    return y + b[None, :, None, None]


def ref_forward(params, x, alpha, steps):
    N, Z = x.shape[0], x.shape[1]
    xv = x.reshape(N, Z)
    xn = xv * lax.rsqrt(jnp.mean(xv * xv, axis=1, keepdims=True) + EPS)
    out = jnp.einsum("nz,zchw->nchw", xn, params["ct_w"]) + params["ct_b"][None, :, None, None]
    out = _leaky(out)
    out = _ref_pn(_leaky(_ref_wsconv(out, params["init_w"], params["init_b"], 3, 1)))
    if steps == 0:
        return _ref_wsconv(out, params["rgb_w"][0], params["rgb_b"][0], 1, 0)
    upscaled = out
    for step in range(steps):
        upscaled = jnp.repeat(jnp.repeat(out, 2, axis=2), 2, axis=3)
        blk = params["blocks"][step]
        h = _ref_pn(_leaky(_ref_wsconv(upscaled, blk["w1"], blk["b1"], 3, 1)))
        out = _ref_pn(_leaky(_ref_wsconv(h, blk["w2"], blk["b2"], 3, 1)))
    fu = _ref_wsconv(upscaled, params["rgb_w"][steps - 1], params["rgb_b"][steps - 1], 1, 0)
    fo = _ref_wsconv(out, params["rgb_w"][steps], params["rgb_b"][steps], 1, 0)
    return jnp.tanh(alpha * fo + (1 - alpha) * fu)


# --------------------------------------------------------------------------
# Deterministic synthetic parameters (shapes follow Generator.__init__).
# --------------------------------------------------------------------------
def init_params(key, z_dim, in_ch, img_ch, steps):
    keys = jax.random.split(key, 8 + 4 * steps)
    ki = iter(range(len(keys)))
    p = {}
    p["ct_w"] = 0.1 * jax.random.normal(keys[next(ki)], (z_dim, in_ch, 4, 4), jnp.float32)
    p["ct_b"] = 0.1 * jax.random.normal(keys[next(ki)], (in_ch,), jnp.float32)
    p["init_w"] = jax.random.normal(keys[next(ki)], (in_ch, in_ch, 3, 3), jnp.float32)
    p["init_b"] = jnp.zeros((in_ch,), jnp.float32)                     # WSConv bias zero-init
    rgb_w = [jax.random.normal(keys[next(ki)], (img_ch, in_ch, 1, 1), jnp.float32)]
    rgb_b = [jnp.zeros((img_ch,), jnp.float32)]
    blocks = []
    for i in range(steps):
        cin = int(in_ch * factors[i])
        cout = int(in_ch * factors[i + 1])
        blocks.append({
            "w1": jax.random.normal(keys[next(ki)], (cout, cin, 3, 3), jnp.float32),
            "b1": jnp.zeros((cout,), jnp.float32),
            "w2": jax.random.normal(keys[next(ki)], (cout, cout, 3, 3), jnp.float32),
            "b2": jnp.zeros((cout,), jnp.float32),
        })
        rgb_w.append(jax.random.normal(keys[next(ki)], (img_ch, cout, 1, 1), jnp.float32))
        rgb_b.append(jnp.zeros((img_ch,), jnp.float32))
    p["blocks"], p["rgb_w"], p["rgb_b"] = blocks, rgb_w, rgb_b
    return p


if __name__ == "__main__":
    Z_DIM, IN_CH, IMG_CH = 32, 16, 3
    N, STEPS, ALPHA = 2, 2, 0.7

    key = jax.random.PRNGKey(0)
    kp, kx = jax.random.split(key)
    params = init_params(kp, Z_DIM, IN_CH, IMG_CH, STEPS)
    x = jax.random.normal(kx, (N, Z_DIM, 1, 1), jnp.float32)

    y_ref = jax.block_until_ready(ref_forward(params, x, ALPHA, STEPS))

    # f32 path: tight validation of the kernel structure.
    y_f32 = jax.block_until_ready(
        generator_forward(params, x, ALPHA, STEPS, compute_dtype=jnp.float32))
    assert y_f32.shape == (N, IMG_CH, 4 * 2 ** STEPS, 4 * 2 ** STEPS), y_f32.shape
    np.testing.assert_allclose(np.asarray(y_f32), np.asarray(y_ref), rtol=5e-4, atol=5e-4)

    # bf16 MXU-input path (production default): relaxed tolerance vs the reference.
    y_bf16 = jax.block_until_ready(
        generator_forward(params, x, ALPHA, STEPS, compute_dtype=jnp.bfloat16))
    assert y_bf16.shape == y_f32.shape, y_bf16.shape
    np.testing.assert_allclose(np.asarray(y_bf16), np.asarray(y_ref), rtol=1e-1, atol=1e-1)

    # steps == 0 path (initial block + initial RGB only).
    y0 = jax.block_until_ready(
        generator_forward(params, x, ALPHA, 0, compute_dtype=jnp.float32))
    y0_ref = jax.block_until_ready(ref_forward(params, x, ALPHA, 0))
    np.testing.assert_allclose(np.asarray(y0), np.asarray(y0_ref), rtol=5e-4, atol=5e-4)

    print("KERNEL_OK")
</pallas_src>

<mosaic_0001>
module attributes {stable_mosaic.version = 11 : i64} {
  func.func @init_kernel(%arg0: i32, %arg1: memref<2x32xf32, #tpu.memory_space<vmem>>, %arg2: memref<32x256xf32, #tpu.memory_space<vmem>>, %arg3: memref<1x256xf32, #tpu.memory_space<vmem>>, %arg4: memref<2x256xf32, #tpu.memory_space<vmem>>) attributes {dimension_semantics = [#tpu.dimension_semantics<arbitrary>], iteration_bounds = array<i64: 1>, scalar_prefetch = 0 : i64, scratch_operands = 0 : i64, tpu.core_type = #tpu.core_type<tc>, window_params = [{pipeline_mode = #tpu.pipeline_mode<synchronous>, transform_indices = @transform_0, window_bounds = array<i64: 2, 32>}, {pipeline_mode = #tpu.pipeline_mode<synchronous>, transform_indices = @transform_1, window_bounds = array<i64: 32, 256>}, {pipeline_mode = #tpu.pipeline_mode<synchronous>, transform_indices = @transform_2, window_bounds = array<i64: 1, 256>}, {pipeline_mode = #tpu.pipeline_mode<synchronous>, transform_indices = @transform_3, window_bounds = array<i64: 2, 256>}]} {
    %c0 = arith.constant 0 : index
    %c0_0 = arith.constant 0 : index
    %0 = vector.load %arg1[%c0, %c0_0] : memref<2x32xf32, #tpu.memory_space<vmem>>, vector<2x32xf32>
    %1 = arith.mulf %0, %0 : vector<2x32xf32>
    %cst = arith.constant dense<0.000000e+00> : vector<2xf32>
    %2 = vector.multi_reduction <add>, %1, %cst [1] : vector<2x32xf32> to vector<2xf32>
    %3 = vector.shape_cast %2 : vector<2xf32> to vector<2x1xf32>
    %cst_1 = arith.constant 3.200000e+01 : f32
    %4 = vector.broadcast %cst_1 : f32 to vector<2x1xf32>
    %5 = arith.divf %3, %4 : vector<2x1xf32>
    %cst_2 = arith.constant 9.99999993E-9 : f32
    %6 = vector.broadcast %cst_2 : f32 to vector<2x1xf32>
    %7 = arith.addf %5, %6 : vector<2x1xf32>
    %8 = math.rsqrt %7 : vector<2x1xf32>
    %9 = vector.broadcast %8 : vector<2x1xf32> to vector<2x32xf32>
    %10 = arith.mulf %0, %9 : vector<2x32xf32>
    %c0_3 = arith.constant 0 : index
    %c0_4 = arith.constant 0 : index
    %11 = vector.load %arg2[%c0_3, %c0_4] : memref<32x256xf32, #tpu.memory_space<vmem>>, vector<32x256xf32>
    %cst_5 = arith.constant dense<0.000000e+00> : vector<2x256xf32>
    %12 = tpu.matmul %10, %11, %cst_5 {dimension_numbers = #tpu.dot_dimension_numbers<[1], [0], [0], [1], [0, 0, 1, 1], [], []>} : vector<2x32xf32>, vector<32x256xf32>, vector<2x256xf32> -> vector<2x256xf32>
    %c0_6 = arith.constant 0 : index
    %c0_7 = arith.constant 0 : index
    %13 = vector.load %arg3[%c0_6, %c0_7] : memref<1x256xf32, #tpu.memory_space<vmem>>, vector<1x256xf32>
    %14 = vector.broadcast %13 : vector<1x256xf32> to vector<2x256xf32>
    %15 = arith.addf %12, %14 : vector<2x256xf32>
    %cst_8 = arith.constant 0.000000e+00 : f32
    %16 = vector.broadcast %cst_8 : f32 to vector<2x256xf32>
    %17 = arith.cmpf ogt, %15, %16 : vector<2x256xf32>
    %cst_9 = arith.constant 2.000000e-01 : f32
    %18 = vector.broadcast %cst_9 : f32 to vector<2x256xf32>
    %19 = arith.mulf %18, %15 : vector<2x256xf32>
    %20 = arith.select %17, %15, %19 : vector<2x256xi1>, vector<2x256xf32>
    %c0_10 = arith.constant 0 : index
    %c0_11 = arith.constant 0 : index
    %21 = vector.load %arg4[%c0_10, %c0_11] : memref<2x256xf32, #tpu.memory_space<vmem>>, vector<2x256xf32>
    tpu.vector_store %arg4[%c0_10, %c0_11], %20 {strides = array<i32>} : memref<2x256xf32, #tpu.memory_space<vmem>>, vector<2x256xf32>,
    return
  }
  func.func @transform_0(%arg0: i32) -> (i32, i32) {
    %c0_i32 = arith.constant 0 : i32
    %c0_i32_0 = arith.constant 0 : i32
    %c0_i32_1 = arith.constant 0 : i32
    return %c0_i32, %c0_i32_0 : i32, i32
  }
  func.func @transform_1(%arg0: i32) -> (i32, i32) {
    %c0_i32 = arith.constant 0 : i32
    %c0_i32_0 = arith.constant 0 : i32
    %c0_i32_1 = arith.constant 0 : i32
    return %c0_i32, %c0_i32_0 : i32, i32
  }
  func.func @transform_2(%arg0: i32) -> (i32, i32) {
    %c0_i32 = arith.constant 0 : i32
    %c0_i32_0 = arith.constant 0 : i32
    %c0_i32_1 = arith.constant 0 : i32
    return %c0_i32, %c0_i32_0 : i32, i32
  }
  func.func @transform_3(%arg0: i32) -> (i32, i32) {
    %c0_i32 = arith.constant 0 : i32
    %c0_i32_0 = arith.constant 0 : i32
    %c0_i32_1 = arith.constant 0 : i32
    return %c0_i32, %c0_i32_0 : i32, i32
  }
}

</mosaic_0001>

<llo_original>
// kernel: tpu_custom_call.1
$region0: #{tpu_custom_call.1}
  #allocation0 [shape = 'u32[]', space=smem, size = 0x4, offset = 0x4, fixed_abs, tag = 'smem constant byte address 0x4 - core index']
  #allocation1 [shape = 'u32[144,128]{1,0:T(1,128)}', space=vmem, size = 0x12000, scoped, tag = 'internal scratch']
  %s0 = inlined_call_operand.hbm [shape: f32[2,32], index: 0, kind: input, shape index: {}]
  %s1 = inlined_call_operand.hbm [shape: f32[32,256], index: 1, kind: input, shape index: {}]
  %s2 = inlined_call_operand.vmem [shape: f32[1,256], index: 2, kind: input, shape index: {}]
  %s3 = inlined_call_operand.hbm [shape: f32[2,256], index: 3, kind: output, shape index: {}]
  %s4 = sld [smem:[#allocation0]]
  $region30: #{tpu_custom_call.1} parent=0
    _
  %s6 = ssub.s32 1, %s4
  %s7 = scalar_select 0, %s6, %s4
  $region1: #{tpu_custom_call.1} parent=0
    #allocation2 [shape = 'u8[1024]{0}', space=vmem, size = 0x400, scoped, tag = 'input window, operand 0, single buffered']
    #allocation3 [shape = 's32[1]{0}', space=sflag, size = 0x4, scoped, tag = 'scoped memory for tpu_custom_call.1']
    #allocation4 [shape = 's32[1]{0}', space=sflag, size = 0x4, scoped, tag = 'scoped memory for tpu_custom_call.1']
    #allocation5 [shape = 'u8[32768]{0}', space=vmem, size = 0x8000, scoped, tag = 'input window, operand 1, single buffered']
    #allocation6 [shape = 's32[1]{0}', space=sflag, size = 0x4, scoped, tag = 'scoped memory for tpu_custom_call.1']
    #allocation7 [shape = 'u8[2048]{0}', space=vmem, size = 0x800, scoped, tag = 'output window, operand 0, single buffered']
    %8 = vsyncpa [#allocation3], 0
    %9 = vsyncpa [#allocation6], 0
    %10 = vsyncpa [#allocation4], 0
    // Predicated region
    $region2: #{tpu_custom_call.1} parent=1 // pred_check
      _
    $region3: #{tpu_custom_call.1} parent=1 // pred_check_branch
      %12 = sbr.rel (0) target = $region5
    $region4: #{tpu_custom_call.1} parent=1 // pred_region
      %s14 = ssub.s32 32, 32
      %15 = vsyncadd [#allocation3], %s14
      %s17 = sshll.u32 [#allocation2], 4
      %s18 = int_to_ptr.vmem [resolvable:$true] %s17
      %20 = dma.hbm_to_vmem [thread:$0]  %s0, 32, %s18, [#allocation3]
    $region5: #{tpu_custom_call.1} parent=1 // pred_fallthru
      _
    // Predicated region
    $region6: #{tpu_custom_call.1} parent=1 // pred_check
      _
    $region7: #{tpu_custom_call.1} parent=1 // pred_check_branch
      %22 = sbr.rel (0) target = $region9
    $region8: #{tpu_custom_call.1} parent=1 // pred_region
      %s24 = ssub.s32 1024, 1024
      %25 = vsyncadd [#allocation6], %s24
      %s26 = sshll.u32 [#allocation5], 4
      %s27 = int_to_ptr.vmem [resolvable:$true] %s26
      %32 = dma.hbm_to_vmem [thread:$0]  %s1, 1024, %s27, [#allocation6], 256, 256, 16
    $region9: #{tpu_custom_call.1} parent=1 // pred_fallthru
      _
    // Predicated region
    $region10: #{tpu_custom_call.1} parent=1 // pred_check
      _
    $region11: #{tpu_custom_call.1} parent=1 // pred_check_branch
      %34 = sbr.rel (0) target = $region13
    $region12: #{tpu_custom_call.1} parent=1 // pred_region
      _
    $region13: #{tpu_custom_call.1} parent=1 // pred_fallthru
      _
    // Predicated region
    $region14: #{tpu_custom_call.1} parent=1 // pred_check
      _
    $region15: #{tpu_custom_call.1} parent=1 // pred_check_branch
      %36 = sbr.rel (0) target = $region17
    $region16: #{tpu_custom_call.1} parent=1 // pred_region
      %37 = dma.done [#allocation3], 32
    $region17: #{tpu_custom_call.1} parent=1 // pred_fallthru
      _
    // Predicated region
    $region18: #{tpu_custom_call.1} parent=1 // pred_check
      _
    $region19: #{tpu_custom_call.1} parent=1 // pred_check_branch
      %39 = sbr.rel (0) target = $region21
    $region20: #{tpu_custom_call.1} parent=1 // pred_region
      %40 = dma.done [#allocation6], 1024
    $region21: #{tpu_custom_call.1} parent=1 // pred_fallthru
      _
    %v41 = vld [vmem:[#allocation2] sm:$0x3]
    %v42 = vmul.f32 %v41, %v41
    %vm43 = vcmask 254976
    %v44 = vsel %vm43, %v42, 0.0
    %45 = vadd.xlane.f32.xlu0 %v44
    %v46 = vpop.xlane.xlu0 %45
    %v47 = vrcp.pop 32.0
    %v48 = vmul.f32 %v46, %v47
    %v49 = vadd.f32 %v48, 1e-08
    %v50 = vrsqrt.pop %v49
    %v51 = vmul.f32 %v41, %v50
    %v52 = vld [vmem:[#allocation5] sm:$0xff]
    %v53 = vld [vmem:[#allocation5 + $0x8] sm:$0xff]
    %v54 = vld [vmem:[#allocation5 + $0x10] sm:$0xff]
    %v55 = vld [vmem:[#allocation5 + $0x18] sm:$0xff]
    %v56 = vld [vmem:[#allocation5 + $0x20] sm:$0xff]
    %v57 = vld [vmem:[#allocation5 + $0x28] sm:$0xff]
    %v58 = vld [vmem:[#allocation5 + $0x30] sm:$0xff]
    %v59 = vld [vmem:[#allocation5 + $0x38] sm:$0xff]
    %v60 = vld [vmem:[%s2] sm:$0x3]
    %v62 = vlaneseq
    %v63 = vshrl.u32 %v62, 7
    %v64 = vsub.s32 0, %v63
    %v65 = vrot.slane %v60, %v64
    %v66 = vlaneseq
    %v67 = vshrl.u32 %v66, 7
    %v68 = vsub.s32 1, %v67
    %v69 = vrot.slane %v60, %v68
    %vm72 = vcmask 261120
    %v74 = vsel %vm72, %v51, 0
    %76 = vmatprep.subr.mxu0 %v53
    %77 = vmatpush1.msra.mxu0 %v52
    %78 = vmatprep.subr.mxu0 %v55
    %79 = vmatpush1.msra.mxu0 %v54
    %80 = vmatprep.subr.mxu0 %v57
    %81 = vmatpush1.msra.mxu0 %v56
    %82 = vmatprep.subr.mxu0 %v59
    %83 = vmatpush1.msra.mxu0 %v58
    %84 = vmatprep.subr.mxu0 0.0
    %85 = vmatpush1.msra.mxu0 0.0
    %86 = vmatprep.subr.mxu0 0.0
    %87 = vmatpush1.msra.mxu0 0.0
    %88 = vmatprep.subr.mxu0 0.0
    %89 = vmatpush1.msra.mxu0 0.0
    %90 = vmatprep.subr.mxu0 0.0
    %91 = vmatpush1.msra.mxu0 0.0
    %92 = vmatprep.subr.mxu0 0.0
    %93 = vmatpush1.msra.mxu0 0.0
    %94 = vmatprep.subr.mxu0 0.0
    %95 = vmatpush1.msra.mxu0 0.0
    %96 = vmatprep.subr.mxu0 0.0
    %97 = vmatpush1.msra.mxu0 0.0
    %98 = vmatprep.subr.mxu0 0.0
    %99 = vmatpush1.msra.mxu0 0.0
    %100 = vmatprep.subr.mxu0 0.0
    %101 = vmatpush1.msra.mxu0 0.0
    %102 = vmatprep.subr.mxu0 0.0
    %103 = vmatpush1.msra.mxu0 0.0
    %104 = vmatprep.subr.mxu0 0.0
    %105 = vmatpush1.msra.mxu0 0.0
    %106 = vmatprep.subr.mxu0 0.0
    %107 = vmatpush1.msra.mxu0 0.0
    %108 = vmatprep.subr.mxu0 0.0
    %109 = vmatpush1.msra.mxu0 0.0
    %110 = vmatprep.subr.mxu0 0.0
    %111 = vmatpush1.msra.mxu0 0.0
    %112 = vmatprep.subr.mxu0 0.0
    %113 = vmatpush1.msra.mxu0 0.0
    %114 = vmatprep.subr.mxu0 0.0
    %115 = vmatpush1.msra.mxu0 0.0
    %116 = vmatprep.subr.mxu0 0.0
    %117 = vmatpush1.msra.mxu0 0.0
    %118 = vmatprep.subr.mxu0 0.0
    %119 = vmatpush1.msra.mxu0 0.0
    %120 = vmatprep.subr.mxu0 0.0
    %121 = vmatpush1.msra.mxu0 0.0
    %122 = vmatprep.subr.mxu0 0.0
    %123 = vmatpush1.msra.mxu0 0.0
    %124 = vmatprep.subr.mxu0 0.0
    %125 = vmatpush1.msra.mxu0 0.0
    %126 = vmatprep.subr.mxu0 0.0
    %127 = vmatpush1.msra.mxu0 0.0
    %128 = vmatprep.subr.mxu0 0.0
    %129 = vmatpush1.msra.mxu0 0.0
    %130 = vmatprep.subr.mxu0 0.0
    %131 = vmatpush1.msra.mxu0 0.0
    %132 = vmatprep.subr.mxu0 0.0
    %133 = vmatpush1.msra.mxu0 0.0
    %134 = vmatprep.subr.mxu0 0.0
    %135 = vmatpush1.msra.mxu0 0.0
    %136 = vmatprep.subr.mxu0 0.0
    %137 = vmatpush1.msra.mxu0 0.0
    %138 = vmatprep.subr.mxu0 0.0
    %139 = vmatpush1.msra.mxu0 0.0
    %140 = vmatprep.mubr.f32.mxu0 0.0
    %141 = vmatmul.mubr.f32.gmra.mrb[0].mxu0 %v74
    %v142 = vpop.f32.mrb[0].mxu0
    %v143 = vadd.f32 %v65, %v142
    %v144 = vpop.f32.mrb[0].mxu0
    %v145 = vadd.f32 %v69, %v144
    %146 = vdwg.mxu0
    %vm147 = vcmp.gt.f32.partialorder %v143, 0.0
    %vm148 = vcmp.gt.f32.partialorder %v145, 0.0
    %v149 = vmul.f32 %v143, 0.2
    %v150 = vmul.f32 %v145, 0.2
    %v151 = vsel %vm147, %v143, %v149
    %v152 = vsel %vm148, %v145, %v150
    %v155 = vcombine.low %v151, %v152
    %v157 = vunpack.c.l.s4 1983009808
    %v158 = vunpack.c.0.s8 %v157
    %v159 = vlaneseq
    %v160 = vshrl.u32 %v159, 7
    %v161 = vsub.s32 %v158, %v160
    %v162 = vrot.slane %v155, %v161
    %164 = vst [vmem:[#allocation7] sm:$0xf] %v162
    // Predicated region
    $region22: #{tpu_custom_call.1} parent=1 // pred_check
      _
    $region23: #{tpu_custom_call.1} parent=1 // pred_check_branch
      %166 = sbr.rel (0) target = $region25
    $region24: #{tpu_custom_call.1} parent=1 // pred_region
      %s168 = ssub.s32 64, 64
      %169 = vsyncadd [#allocation4], %s168
      %s171 = sshll.u32 [#allocation7], 4
      %s172 = int_to_ptr.vmem [resolvable:$true] %s171
      %174 = dma.vmem_to_hbm [thread:$0]  %s172, 64, %s3, [#allocation4]
    $region25: #{tpu_custom_call.1} parent=1 // pred_fallthru
      _
    // Predicated region
    $region26: #{tpu_custom_call.1} parent=1 // pred_check
      _
    $region27: #{tpu_custom_call.1} parent=1 // pred_check_branch
      %176 = sbr.rel (0) target = $region29
    $region28: #{tpu_custom_call.1} parent=1 // pred_region
      %177 = dma.done [#allocation4], 64
    $region29: #{tpu_custom_call.1} parent=1 // pred_fallthru
      _
    %178 = vsyncpa [#allocation3], 1
    %179 = vsyncpa [#allocation6], 1
    %180 = vsyncpa [#allocation4], 1

</llo_original>
